<compile_context>
chip_gen: v6e
topology: v6e:2x2x1
jax: 0.10.0
libtpu: 0.0.40
codegen_flags: <defaults>
</compile_context>

<pallas_src>
import functools
import math

import jax
import jax.numpy as jnp
from jax import lax
from jax.experimental import pallas as pl
from jax.experimental.pallas import tpu as pltpu


# ---------------------------------------------------------------------------
# Kernel body: static permutation with period `w` along the lane axis of a
# (row_tile, L) block, L % w == 0.
#
# Output order within each period: [0 .. k//2-1, k .. w-1, k//2 .. k-1]:
#   seg1 (pos <  k//2)     : out[i] = x[i]
#   seg2 (pos <  w-ceil(k/2)): out[i] = x[i + ceil(k/2)]   (lane roll left)
#   seg3 (otherwise)        : out[i] = x[i - (w - k)]      (lane roll right)
# All shifts/masks are compile-time static; selected lanes never read across a
# period (original-row) boundary, so grouping g rows per lane-row is safe.
# ---------------------------------------------------------------------------
def _fno_perm_kernel(x_ref, o_ref, *, w, kernel_size):
    x = x_ref[...]
    L = x.shape[-1]
    k = kernel_size
    half = k // 2          # width of first output segment
    c = k - half           # width of third output segment (= ceil(k/2))

    # Lane position within each period of width w (static constant pattern).
    pos = lax.broadcasted_iota(jnp.int32, x.shape, 1) % w

    # Segment 2: out[i] = x[i + c]   (pltpu.roll: out[i] = x[i - shift mod L])
    s2 = (L - c) % L
    x2 = pltpu.roll(x, s2, 1) if s2 else x
    # Segment 3: out[i] = x[i - (w - k)]
    s3 = (w - k) % L
    x3 = pltpu.roll(x, s3, 1) if s3 else x

    o_ref[...] = jnp.where(pos < half, x, jnp.where(pos < w - c, x2, x3))


# ---------------------------------------------------------------------------
# Chip-aware sizing.
# ---------------------------------------------------------------------------
def _chip_config():
    """Return (target_block_bytes, vmem_limit_bytes, multi_tensorcore)."""
    vmem_cap = 128 * 1024 * 1024
    try:
        vmem_cap = int(getattr(pltpu.get_tpu_info(), "vmem_capacity_bytes", vmem_cap))
    except Exception:
        pass
    if vmem_cap <= 64 * 1024 * 1024:
        # v7x-class: 64 MiB VMEM/TC, ~3.2 TB/s HBM, 2 TensorCores share the
        # "parallel" grid axis.  ~5 MiB blocks amortize the ~0.35 us/step
        # overhead while 4 double-buffers + temporaries stay well under VMEM.
        return 5 * 1024 * 1024, 44 * 1024 * 1024, True
    # v5e / v6e: 128 MiB VMEM, single TensorCore.  v5e's scoped default is only
    # 16 MiB, so the explicit limit is load-bearing there; 8 MiB blocks sit on
    # the measured HBM-roofline plateau.
    return 8 * 1024 * 1024, 64 * 1024 * 1024, False


def _pick_row_tile(R, bytes_per_row, sub, target_block_bytes, multi_tc):
    """Pick a row tile (multiple of `sub`, or full R) for a (R, L) array."""
    total = R * bytes_per_row
    if total <= target_block_bytes:
        # Whole array fits in one block.  Split only on multi-TC parts, where
        # a 2-block grid lets both TensorCores work; on single-TC chips the
        # extra grid step is pure overhead.
        if multi_tc and total >= (1 << 20) and R >= 2 * sub:
            want_blocks = 2
        else:
            return R
    else:
        want_blocks = pl.cdiv(total, target_block_bytes)
        if multi_tc and want_blocks % 2 == 1:
            want_blocks += 1  # balanced block count for the two TensorCores
    row_tile = pl.cdiv(pl.cdiv(R, want_blocks), sub) * sub
    if row_tile >= R:
        return R
    return row_tile


# ---------------------------------------------------------------------------
# Pallas driver on a 2-D (R, L) view, L % w == 0.
# ---------------------------------------------------------------------------
def _fno_perm_2d(x2d, *, w, kernel_size, target_block_bytes, vmem_limit_bytes,
                 multi_tc, donate_input=False):
    R, L = x2d.shape
    itemsize = jnp.dtype(x2d.dtype).itemsize
    sub = {4: 8, 2: 16, 1: 32}.get(itemsize, 8)  # sublane packing per dtype
    row_tile = _pick_row_tile(R, L * itemsize, sub, target_block_bytes, multi_tc)
    grid = (pl.cdiv(R, row_tile),)  # partial last block instead of padding

    kernel = functools.partial(_fno_perm_kernel, w=w, kernel_size=kernel_size)

    return pl.pallas_call(
        kernel,
        out_shape=jax.ShapeDtypeStruct((R, L), x2d.dtype),
        grid_spec=pltpu.PrefetchScalarGridSpec(
            num_scalar_prefetch=0,
            grid=grid,
            in_specs=[pl.BlockSpec((row_tile, L), lambda i: (i, 0))],
            out_specs=pl.BlockSpec((row_tile, L), lambda i: (i, 0)),
        ),
        compiler_params=pltpu.CompilerParams(
            dimension_semantics=("parallel",),
            vmem_limit_bytes=vmem_limit_bytes,
        ),
        input_output_aliases=({0: 0} if donate_input else {}),
    )(x2d)


# ---------------------------------------------------------------------------
# Public entry point: any rank >= 1, any dtype.
# ---------------------------------------------------------------------------
def fno_perm(x, kernel_size=1, *, target_block_bytes=None, vmem_limit_bytes=None,
             donate_input=False):
    orig_shape = x.shape
    w = orig_shape[-1]
    k = int(kernel_size)
    assert 0 <= k <= w, "kernel_size must be in [0, last_dim]"

    # Identity configs: skip the HBM read+write round trip entirely.
    if k == 0 or k == w or w == 1:
        return x

    rows = 1
    for d in orig_shape[:-1]:
        rows *= d
    if rows == 0:
        return x

    chip_block, chip_vmem, multi_tc = _chip_config()
    if target_block_bytes is None:
        target_block_bytes = chip_block
    if vmem_limit_bytes is None:
        vmem_limit_bytes = chip_vmem

    # Lane-dense grouping: fold g consecutive rows so L = g*w is a multiple of
    # 128 (full 128-lane vld/vst instead of masked partial stores).
    if w % 128 == 0:
        g = 1
    else:
        g = math.lcm(w, 128) // w
        if g * w > 32768:
            g = 1  # only reachable for w > 256, where masked-lane waste is small

    call = functools.partial(
        _fno_perm_2d, w=w, kernel_size=k,
        target_block_bytes=target_block_bytes,
        vmem_limit_bytes=vmem_limit_bytes,
        multi_tc=multi_tc, donate_input=donate_input)

    if rows % g == 0:
        out2d = call(x.reshape(rows // g, g * w))  # metadata-only reshape
        return out2d.reshape(orig_shape)

    # rows % g != 0: keep the bulk lane-dense and run a tiny second call
    # (lane width w) on the < g leftover rows.  The slice/concat costs one
    # extra HBM pass but avoids reverting the whole array to masked stores.
    main_rows = (rows // g) * g
    x_flat = x.reshape(rows, w)
    out_main = call(x_flat[:main_rows].reshape(main_rows // g, g * w))
    out_rem = call(x_flat[main_rows:])
    out2d = jnp.concatenate([out_main.reshape(main_rows, w), out_rem], axis=0)
    return out2d.reshape(orig_shape)


def fno_perm_reference(x, kernel_size=1):
    k = kernel_size
    return jnp.concatenate(
        [x[..., : k // 2], x[..., k:], x[..., k // 2 : k]], axis=-1
    )


if __name__ == "__main__":
    def check(x, k, **kw):
        out = jax.block_until_ready(fno_perm(x, kernel_size=k, **kw))
        ref = fno_perm_reference(x, kernel_size=k)
        assert out.shape == ref.shape, (out.shape, ref.shape, k)
        assert jnp.array_equal(out, ref), (
            f"mismatch: k={k}, shape={x.shape}, dtype={x.dtype}")

    key = jax.random.PRNGKey(0)
    # NCHW input, matching PyTorch conv-style inputs (primary case).
    x = jax.random.normal(key, (2, 4, 16, 16), dtype=jnp.float32)
    for k in (0, 1, 3, 4, 16):   # identity, default, odd, even, identity
        check(x, k)

    # bf16 (packed sublanes, 16-row sublane rounding).
    check(x.astype(jnp.bfloat16), 5)

    k2, k3, k4 = jax.random.split(jax.random.PRNGKey(1), 3)
    # Last dim that does not divide 128 (periods straddle vreg boundaries).
    check(jax.random.normal(k2, (2, 3, 8, 48), dtype=jnp.float32), 5)
    # rows % g != 0: lane-dense bulk + small remainder call.
    check(jax.random.normal(k3, (3, 5, 16), dtype=jnp.float32), 3)
    # Force a multi-block grid with a partial last block.
    check(jax.random.normal(k4, (5, 4, 16, 16), dtype=jnp.float32), 4,
          target_block_bytes=8192)

    print("KERNEL_OK")
</pallas_src>

<mosaic_0001>
module attributes {stable_mosaic.version = 11 : i64} {
  func.func @_fno_perm_kernel(%arg0: i32, %arg1: memref<16x128xf32, #tpu.memory_space<vmem>>, %arg2: memref<16x128xf32, #tpu.memory_space<vmem>>) attributes {dimension_semantics = [#tpu.dimension_semantics<parallel>], iteration_bounds = array<i64: 1>, scalar_prefetch = 0 : i64, scratch_operands = 0 : i64, tpu.core_type = #tpu.core_type<tc>, window_params = [{transform_indices = @transform_0, window_bounds = array<i64: 16, 128>}, {transform_indices = @transform_1, window_bounds = array<i64: 16, 128>}]} {
    %c0 = arith.constant 0 : index
    %c0_0 = arith.constant 0 : index
    %0 = vector.load %arg1[%c0, %c0_0] : memref<16x128xf32, #tpu.memory_space<vmem>>, vector<16x128xf32>
    %1 = tpu.iota {dimensions = array<i32: 1>} : vector<16x128xi32>
    %c16_i32 = arith.constant 16 : i32
    %c0_i32 = arith.constant 0 : i32
    %2 = arith.cmpi eq, %c16_i32, %c0_i32 : i32
    %c1_i32 = arith.constant 1 : i32
    %3 = arith.select %2, %c1_i32, %c16_i32 : i32
    %4 = vector.broadcast %3 : i32 to vector<16x128xi32>
    %5 = arith.remsi %1, %4 : vector<16x128xi32>
    %c0_i32_1 = arith.constant 0 : i32
    %6 = vector.broadcast %c0_i32_1 : i32 to vector<16x128xi32>
    %7 = arith.cmpi ne, %5, %6 : vector<16x128xi32>
    %c0_i32_2 = arith.constant 0 : i32
    %8 = vector.broadcast %c0_i32_2 : i32 to vector<16x128xi32>
    %9 = arith.cmpi slt, %5, %8 : vector<16x128xi32>
    %c0_i32_3 = arith.constant 0 : i32
    %10 = arith.cmpi slt, %3, %c0_i32_3 : i32
    %11 = vector.broadcast %10 : i1 to vector<16x128xi1>
    %12 = vector.broadcast %11 : vector<16x128xi1> to vector<16x128xi1>
    %13 = arith.xori %9, %12 : vector<16x128xi1>
    %14 = arith.andi %13, %7 : vector<16x128xi1>
    %15 = vector.broadcast %3 : i32 to vector<16x128xi32>
    %16 = arith.addi %5, %15 : vector<16x128xi32>
    %17 = arith.select %14, %16, %5 : vector<16x128xi1>, vector<16x128xi32>
    %c127_i32 = arith.constant 127 : i32
    %18 = tpu.dynamic_rotate %0 by %c127_i32 dim 1 : vector<16x128xf32>, i32 -> vector<16x128xf32>
    %c15_i32 = arith.constant 15 : i32
    %19 = tpu.dynamic_rotate %0 by %c15_i32 dim 1 : vector<16x128xf32>, i32 -> vector<16x128xf32>
    %c0_i32_4 = arith.constant 0 : i32
    %20 = vector.broadcast %c0_i32_4 : i32 to vector<16x128xi32>
    %21 = arith.cmpi slt, %17, %20 : vector<16x128xi32>
    %c15_i32_5 = arith.constant 15 : i32
    %22 = vector.broadcast %c15_i32_5 : i32 to vector<16x128xi32>
    %23 = arith.cmpi slt, %17, %22 : vector<16x128xi32>
    %24 = arith.select %23, %18, %19 : vector<16x128xi1>, vector<16x128xf32>
    %25 = arith.select %21, %0, %24 : vector<16x128xi1>, vector<16x128xf32>
    %c0_6 = arith.constant 0 : index
    %c0_7 = arith.constant 0 : index
    %26 = vector.load %arg2[%c0_6, %c0_7] : memref<16x128xf32, #tpu.memory_space<vmem>>, vector<16x128xf32>
    tpu.vector_store %arg2[%c0_6, %c0_7], %25 {strides = array<i32>} : memref<16x128xf32, #tpu.memory_space<vmem>>, vector<16x128xf32>,
    return
  }
  func.func @transform_0(%arg0: i32) -> (i32, i32) {
    %c0_i32 = arith.constant 0 : i32
    %c0_i32_0 = arith.constant 0 : i32
    return %arg0, %c0_i32 : i32, i32
  }
  func.func @transform_1(%arg0: i32) -> (i32, i32) {
    %c0_i32 = arith.constant 0 : i32
    %c0_i32_0 = arith.constant 0 : i32
    return %arg0, %c0_i32 : i32, i32
  }
}

</mosaic_0001>

<llo_original>
// kernel: tpu_custom_call.1
$region0: #{tpu_custom_call.1}
  #allocation0 [shape = 'u32[]', space=smem, size = 0x4, offset = 0x4, fixed_abs, tag = 'smem constant byte address 0x4 - core index']
  #allocation1 [shape = 'u32[144,128]{1,0:T(1,128)}', space=vmem, size = 0x12000, scoped, tag = 'internal scratch']
  %s0 = inlined_call_operand.hbm [shape: f32[16,128], index: 0, kind: input, shape index: {}]
  %s1 = inlined_call_operand.hbm [shape: f32[16,128], index: 1, kind: output, shape index: {}]
  %s2 = sld [smem:[#allocation0]]
  $region18: #{tpu_custom_call.1} parent=0
    _
  %s4 = ssub.s32 1, %s2
  %s5 = scalar_select 0, %s4, %s2
  $region1: #{tpu_custom_call.1} parent=0
    #allocation2 [shape = 'u8[8192]{0}', space=vmem, size = 0x2000, scoped, tag = 'input window, operand 0, single buffered']
    #allocation3 [shape = 's32[1]{0}', space=sflag, size = 0x4, scoped, tag = 'scoped memory for tpu_custom_call.1']
    #allocation4 [shape = 's32[1]{0}', space=sflag, size = 0x4, scoped, tag = 'scoped memory for tpu_custom_call.1']
    #allocation5 [shape = 'u8[8192]{0}', space=vmem, size = 0x2000, scoped, tag = 'output window, operand 0, single buffered']
    %6 = vsyncpa [#allocation3], 0
    %7 = vsyncpa [#allocation4], 0
    // Predicated region
    $region2: #{tpu_custom_call.1} parent=1 // pred_check
      _
    $region3: #{tpu_custom_call.1} parent=1 // pred_check_branch
      %9 = sbr.rel (0) target = $region5
    $region4: #{tpu_custom_call.1} parent=1 // pred_region
      %s11 = ssub.s32 256, 256
      %12 = vsyncadd [#allocation3], %s11
      %s13 = sshll.u32 [#allocation2], 4
      %s14 = int_to_ptr.vmem [resolvable:$true] %s13
      %19 = dma.hbm_to_vmem [thread:$0]  %s0, 256, %s14, [#allocation3], 128, 128, 8
    $region5: #{tpu_custom_call.1} parent=1 // pred_fallthru
      _
    // Predicated region
    $region6: #{tpu_custom_call.1} parent=1 // pred_check
      _
    $region7: #{tpu_custom_call.1} parent=1 // pred_check_branch
      %21 = sbr.rel (0) target = $region9
    $region8: #{tpu_custom_call.1} parent=1 // pred_region
      %22 = dma.done [#allocation3], 256
    $region9: #{tpu_custom_call.1} parent=1 // pred_fallthru
      _
    %v23 = vld [vmem:[#allocation2] sm:$0xff]
    %v24 = vld [vmem:[#allocation2 + $0x8] sm:$0xff]
    %v25 = vlaneseq
    %v26 = vand.u32 %v25, 127
    %vm27 = vcmp.lt.s32.totalorder %v26, 0
    %v28 = vsub.s32 0, %v26
    %v29 = vsel %vm27, %v28, %v26
    %v30 = vshrl.u32 %v29, 4
    %v31 = vand.u32 %v29, 15
    %v32 = vsub.s32 0, %v31
    %v33 = vsel %vm27, %v32, %v31
    %vm34 = vcmp.ne.s32.totalorder %v33, 0
    %vm35 = vcmp.lt.s32.totalorder %v33, 0
    %vm36 = vmand %vm35, %vm34
    %v37 = vadd.s32 %v33, 16
    %v38 = vsel %vm36, %v37, %v33
    %39 = vrot.lane.b32.xlu0 %v23, 127
    %v40 = vpop.permute.xlu0 %39
    %41 = vrot.lane.b32.xlu0 %v24, 127
    %v42 = vpop.permute.xlu0 %41
    %43 = vrot.lane.b32.xlu0 %v23, 15
    %v44 = vpop.permute.xlu0 %43
    %45 = vrot.lane.b32.xlu0 %v24, 15
    %v46 = vpop.permute.xlu0 %45
    %vm47 = vcmp.lt.s32.totalorder %v38, 0
    %vm48 = vcmp.lt.s32.totalorder %v38, 15
    %v49 = vsel %vm48, %v40, %v44
    %v50 = vsel %vm48, %v42, %v46
    %v51 = vsel %vm47, %v23, %v49
    %v52 = vsel %vm47, %v24, %v50
    %53 = vst [vmem:[#allocation5] sm:$0xff] %v51
    %54 = vst [vmem:[#allocation5 + $0x8] sm:$0xff] %v52
    // Predicated region
    $region10: #{tpu_custom_call.1} parent=1 // pred_check
      _
    $region11: #{tpu_custom_call.1} parent=1 // pred_check_branch
      %56 = sbr.rel (0) target = $region13
    $region12: #{tpu_custom_call.1} parent=1 // pred_region
      %s58 = ssub.s32 256, 256
      %59 = vsyncadd [#allocation4], %s58
      %s60 = sshll.u32 [#allocation5], 4
      %s61 = int_to_ptr.vmem [resolvable:$true] %s60
      %66 = dma.vmem_to_hbm [thread:$0]  %s61, 256, %s1, [#allocation4], 128, 128, 8
    $region13: #{tpu_custom_call.1} parent=1 // pred_fallthru
      _
    // Predicated region
    $region14: #{tpu_custom_call.1} parent=1 // pred_check
      _
    $region15: #{tpu_custom_call.1} parent=1 // pred_check_branch
      %68 = sbr.rel (0) target = $region17
    $region16: #{tpu_custom_call.1} parent=1 // pred_region
      %69 = dma.done [#allocation4], 256
    $region17: #{tpu_custom_call.1} parent=1 // pred_fallthru
      _
    %70 = vsyncpa [#allocation3], 1
    %71 = vsyncpa [#allocation4], 1

</llo_original>
